<compile_context>
chip_gen: v7x
topology: tpu7x:2x2x1
jax: 0.10.0
libtpu: 0.0.40
codegen_flags: <defaults>
</compile_context>

<pallas_src>
import functools

import jax
import jax.numpy as jnp
from jax.experimental import pallas as pl
from jax.experimental.pallas import tpu as pltpu


def _shortcut_kernel(x_ref, s_ref, o_ref, *, n_block, channels, pad):
    """One grid step: n_block images -> subsampled + channel-padded output.

    x_ref: (n_block*C, H*W)        lane-dense flattened input images
    s_ref: (H*W, Ho*Wo)            exact 0/1 subsample-selection matrix (bf16)
    o_ref: (n_block, C_out, Ho*Wo) lane-dense flattened output, C_out = C+2*pad
    """
    C = channels
    HoWo = o_ref.shape[-1]

    x = x_ref[...]
    s = s_ref[...]

    if x.dtype == jnp.float32:
        # Exact f32 selection in 3 MXU passes: x == hi + mid + lo (bf16 chunks).
        # S is 0/1, so each partial product is exact and the f32 accumulation
        # reassembles x (cheaper than an f32 Precision.HIGHEST dot).
        hi = x.astype(jnp.bfloat16)
        r1 = x - hi.astype(jnp.float32)
        mid = r1.astype(jnp.bfloat16)
        lo = (r1 - mid.astype(jnp.float32)).astype(jnp.bfloat16)
        y = (jnp.dot(hi, s, preferred_element_type=jnp.float32)
             + jnp.dot(mid, s, preferred_element_type=jnp.float32)
             + jnp.dot(lo, s, preferred_element_type=jnp.float32))
    else:
        # bf16 etc.: a single pass is already exact for a 0/1 selection.
        y = jnp.dot(x, s.astype(x.dtype), preferred_element_type=jnp.float32)

    # Channel zero-padding: touch only the pad slices (no redundant zeroing of
    # the data channels -> data channels are stored exactly once, below).
    if pad:
        o_ref[:, :pad, :] = jnp.zeros((n_block, pad, HoWo), o_ref.dtype)
        o_ref[:, pad + C:, :] = jnp.zeros((n_block, pad, HoWo), o_ref.dtype)

    y = y.astype(o_ref.dtype)
    if C % 8 == 0:
        # Free reshape (splits the sublane dim into (n_block, C), C % 8 == 0).
        o_ref[:, pad:pad + C, :] = y.reshape(n_block, C, HoWo)
    else:
        # Small static fallback for toy channel counts (C not sublane-aligned).
        for b in range(n_block):
            o_ref[b, pad:pad + C, :] = y[b * C:(b + 1) * C, :]


def _pick_block_n(N, C, bytes_per_image, target_block_bytes=2 << 20):
    """Largest batch block that (a) divides N, (b) keeps the input BlockSpec's
    second-minor dim (Nb*C) a multiple of 8 (or the full dim), (c) stays under
    a VMEM budget (safe on v7x's smaller VMEM), and (d) leaves >=2 grid steps
    when possible so both v7x TensorCores get work."""
    aligned = [nb for nb in range(1, N + 1)
               if N % nb == 0 and ((nb * C) % 8 == 0 or nb == N)]
    in_budget = [nb for nb in aligned
                 if nb * bytes_per_image <= target_block_bytes]
    pool = in_budget or [min(aligned)]
    multi_step = [nb for nb in pool if N // nb >= 2]
    return max(multi_step or pool)


def lambda_layer(x, planes, *, target_block_bytes=2 << 20):
    """Pallas TPU version of the ResNet-32 option-A shortcut LambdaLayer."""
    N, C, H, W = x.shape
    Ho, Wo = (H + 1) // 2, (W + 1) // 2      # matches x[:, :, ::2, ::2]
    pad = planes // 4
    C_out = C + 2 * pad
    HW, HoWo = H * W, Ho * Wo

    # 0/1 selection matrix: S[2*i*W + 2*j, i*Wo + j] = 1  (exact in bf16).
    cols = jnp.arange(HoWo, dtype=jnp.int32)
    src = 2 * (cols // Wo) * W + 2 * (cols % Wo)
    sel = jnp.zeros((HW, HoWo), jnp.bfloat16).at[src, cols].set(1)

    nb = _pick_block_n(N, C, C * HW * x.dtype.itemsize, target_block_bytes)
    grid = (N // nb,)

    # Free row-major reshape -> lane-dense input slab (last dim H*W).
    x2 = x.reshape(N * C, HW)

    kernel = functools.partial(_shortcut_kernel,
                               n_block=nb, channels=C, pad=pad)
    out = pl.pallas_call(
        kernel,
        out_shape=jax.ShapeDtypeStruct((N, C_out, HoWo), x.dtype),
        grid_spec=pltpu.PrefetchScalarGridSpec(
            num_scalar_prefetch=0,
            grid=grid,
            in_specs=[
                pl.BlockSpec((nb * C, HW), lambda n: (n, 0)),
                # Grid-invariant selection matrix: constant block index, so the
                # pipeline fetches it once and skips re-DMA on later steps.
                pl.BlockSpec((HW, HoWo), lambda n: (0, 0)),
            ],
            out_specs=pl.BlockSpec((nb, C_out, HoWo), lambda n: (n, 0, 0)),
        ),
        compiler_params=pltpu.CompilerParams(
            dimension_semantics=("parallel",)),
    )(x2, sel)

    # Free reshape back to NCHW.
    return out.reshape(N, C_out, Ho, Wo)


if __name__ == "__main__":
    key = jax.random.PRNGKey(0)
    N, C, H, W = 2, 4, 16, 16
    planes = 8  # pad = planes // 4 = 2 channels each side -> C_out = 8
    x = jax.random.normal(key, (N, C, H, W), dtype=jnp.float32)

    out = jax.block_until_ready(lambda_layer(x, planes))

    # Reference for the PyTorch lambda:
    #   F.pad(x[:, :, ::2, ::2], (0,0,0,0, planes//4, planes//4), "constant", 0)
    ref = jnp.pad(x[:, :, ::2, ::2],
                  ((0, 0), (planes // 4, planes // 4), (0, 0), (0, 0)))
    assert out.shape == ref.shape == (N, C + 2 * (planes // 4), H // 2, W // 2)
    assert out.dtype == ref.dtype == jnp.float32
    assert jnp.allclose(out, ref, atol=1e-6, rtol=1e-6)
    print("KERNEL_OK")
</pallas_src>

<mosaic_0001>
module attributes {stable_mosaic.version = 11 : i64} {
  func.func @_shortcut_kernel(%arg0: i32, %arg1: memref<8x256xf32, #tpu.memory_space<vmem>>, %arg2: memref<256x64xbf16, #tpu.memory_space<vmem>>, %arg3: memref<2x8x64xf32, #tpu.memory_space<vmem>>) attributes {dimension_semantics = [#tpu.dimension_semantics<parallel>], iteration_bounds = array<i64: 1>, scalar_prefetch = 0 : i64, scratch_operands = 0 : i64, tpu.core_type = #tpu.core_type<tc>, window_params = [{transform_indices = @transform_0, window_bounds = array<i64: 8, 256>}, {pipeline_mode = #tpu.pipeline_mode<synchronous>, transform_indices = @transform_1, window_bounds = array<i64: 256, 64>}, {transform_indices = @transform_2, window_bounds = array<i64: 2, 8, 64>}]} {
    %c0 = arith.constant 0 : index
    %c0_0 = arith.constant 0 : index
    %0 = vector.load %arg1[%c0, %c0_0] : memref<8x256xf32, #tpu.memory_space<vmem>>, vector<8x256xf32>
    %c0_1 = arith.constant 0 : index
    %c0_2 = arith.constant 0 : index
    %1 = vector.load %arg2[%c0_1, %c0_2] : memref<256x64xbf16, #tpu.memory_space<vmem>>, vector<256x64xbf16>
    %2 = arith.truncf %0 : vector<8x256xf32> to vector<8x256xbf16>
    %3 = arith.extf %2 : vector<8x256xbf16> to vector<8x256xf32>
    %4 = arith.subf %0, %3 : vector<8x256xf32>
    %5 = arith.truncf %4 : vector<8x256xf32> to vector<8x256xbf16>
    %6 = arith.extf %5 : vector<8x256xbf16> to vector<8x256xf32>
    %7 = arith.subf %4, %6 : vector<8x256xf32>
    %8 = arith.truncf %7 : vector<8x256xf32> to vector<8x256xbf16>
    %cst = arith.constant dense<0.000000e+00> : vector<8x64xf32>
    %9 = tpu.matmul %2, %1, %cst {dimension_numbers = #tpu.dot_dimension_numbers<[1], [0], [0], [1], [0, 0, 1, 1], [], []>} : vector<8x256xbf16>, vector<256x64xbf16>, vector<8x64xf32> -> vector<8x64xf32>
    %cst_3 = arith.constant dense<0.000000e+00> : vector<8x64xf32>
    %10 = tpu.matmul %5, %1, %cst_3 {dimension_numbers = #tpu.dot_dimension_numbers<[1], [0], [0], [1], [0, 0, 1, 1], [], []>} : vector<8x256xbf16>, vector<256x64xbf16>, vector<8x64xf32> -> vector<8x64xf32>
    %11 = arith.addf %9, %10 : vector<8x64xf32>
    %cst_4 = arith.constant dense<0.000000e+00> : vector<8x64xf32>
    %12 = tpu.matmul %8, %1, %cst_4 {dimension_numbers = #tpu.dot_dimension_numbers<[1], [0], [0], [1], [0, 0, 1, 1], [], []>} : vector<8x256xbf16>, vector<256x64xbf16>, vector<8x64xf32> -> vector<8x64xf32>
    %13 = arith.addf %11, %12 : vector<8x64xf32>
    %cst_5 = arith.constant 0.000000e+00 : f32
    %14 = vector.broadcast %cst_5 : f32 to vector<2x2x64xf32>
    %c0_6 = arith.constant 0 : index
    %c0_7 = arith.constant 0 : index
    %c0_8 = arith.constant 0 : index
    %15 = vector.load %arg3[%c0_6, %c0_7, %c0_8] : memref<2x8x64xf32, #tpu.memory_space<vmem>>, vector<2x2x64xf32>
    tpu.vector_store %arg3[%c0_6, %c0_7, %c0_8], %14 {strides = array<i32>} : memref<2x8x64xf32, #tpu.memory_space<vmem>>, vector<2x2x64xf32>,
    %cst_9 = arith.constant 0.000000e+00 : f32
    %16 = vector.broadcast %cst_9 : f32 to vector<2x2x64xf32>
    %c0_10 = arith.constant 0 : index
    %c6 = arith.constant 6 : index
    %c0_11 = arith.constant 0 : index
    %17 = vector.load %arg3[%c0_10, %c6, %c0_11] : memref<2x8x64xf32, #tpu.memory_space<vmem>>, vector<2x2x64xf32>
    tpu.vector_store %arg3[%c0_10, %c6, %c0_11], %16 {strides = array<i32>} : memref<2x8x64xf32, #tpu.memory_space<vmem>>, vector<2x2x64xf32>,
    %18 = vector.extract_strided_slice %13 {offsets = [0, 0], sizes = [4, 64], strides = [1, 1]} : vector<8x64xf32> to vector<4x64xf32>
    %c0_12 = arith.constant 0 : index
    %c2 = arith.constant 2 : index
    %c0_13 = arith.constant 0 : index
    %19 = vector.load %arg3[%c0_12, %c2, %c0_13] : memref<2x8x64xf32, #tpu.memory_space<vmem>>, vector<1x4x64xf32>
    %20 = vector.shape_cast %19 : vector<1x4x64xf32> to vector<4x64xf32>
    %21 = vector.shape_cast %18 : vector<4x64xf32> to vector<1x4x64xf32>
    tpu.vector_store %arg3[%c0_12, %c2, %c0_13], %21 {strides = array<i32>} : memref<2x8x64xf32, #tpu.memory_space<vmem>>, vector<1x4x64xf32>,
    %22 = vector.extract_strided_slice %13 {offsets = [4, 0], sizes = [4, 64], strides = [1, 1]} : vector<8x64xf32> to vector<4x64xf32>
    %c1 = arith.constant 1 : index
    %c2_14 = arith.constant 2 : index
    %c0_15 = arith.constant 0 : index
    %23 = vector.load %arg3[%c1, %c2_14, %c0_15] : memref<2x8x64xf32, #tpu.memory_space<vmem>>, vector<1x4x64xf32>
    %24 = vector.shape_cast %23 : vector<1x4x64xf32> to vector<4x64xf32>
    %25 = vector.shape_cast %22 : vector<4x64xf32> to vector<1x4x64xf32>
    tpu.vector_store %arg3[%c1, %c2_14, %c0_15], %25 {strides = array<i32>} : memref<2x8x64xf32, #tpu.memory_space<vmem>>, vector<1x4x64xf32>,
    return
  }
  func.func @transform_0(%arg0: i32) -> (i32, i32) {
    %c0_i32 = arith.constant 0 : i32
    %c0_i32_0 = arith.constant 0 : i32
    return %arg0, %c0_i32 : i32, i32
  }
  func.func @transform_1(%arg0: i32) -> (i32, i32) {
    %c0_i32 = arith.constant 0 : i32
    %c0_i32_0 = arith.constant 0 : i32
    %c0_i32_1 = arith.constant 0 : i32
    return %c0_i32, %c0_i32_0 : i32, i32
  }
  func.func @transform_2(%arg0: i32) -> (i32, i32, i32) {
    %c0_i32 = arith.constant 0 : i32
    %c0_i32_0 = arith.constant 0 : i32
    %c0_i32_1 = arith.constant 0 : i32
    return %arg0, %c0_i32, %c0_i32_0 : i32, i32, i32
  }
}

</mosaic_0001>

<llo_original>
// kernel: tpu_custom_call.1
$region0: #{tpu_custom_call.1}
  #allocation0 [shape = 'u32[]', space=smem, size = 0x4, offset = 0x4, fixed_abs, tag = 'smem constant byte address 0x4 - core index']
  #allocation1 [shape = 'u32[144,128]{1,0:T(1,128)}', space=vmem, size = 0x12000, scoped, tag = 'internal scratch']
  %s0 = inlined_call_operand.vmem [shape: f32[8,256], index: 0, kind: input, shape index: {}]
  %s1 = inlined_call_operand.vmem [shape: bf16[256,64], index: 1, kind: input, shape index: {}]
  %s2 = inlined_call_operand.hbm [shape: f32[2,8,64], index: 2, kind: output, shape index: {}]
  %s3 = sld [smem:[#allocation0]]
  $region18: #{tpu_custom_call.1} parent=0
    _
  %s5 = ssub.s32 1, %s3
  %s6 = scalar_select 0, %s5, %s3
  $region1: #{tpu_custom_call.1} parent=0
    #allocation2 [shape = 'u8[8192]{0}', space=vmem, size = 0x2000, scoped, tag = 'output window, operand 0, single buffered']
    #allocation3 [shape = 's32[1]{0}', space=sflag, size = 0x4, scoped, tag = 'scoped memory for tpu_custom_call.1']
    %7 = vsyncpa [#allocation3], 0
    // Predicated region
    $region2: #{tpu_custom_call.1} parent=1 // pred_check
      _
    $region3: #{tpu_custom_call.1} parent=1 // pred_check_branch
      %9 = sbr.rel (0) target = $region5
    $region4: #{tpu_custom_call.1} parent=1 // pred_region
      _
    $region5: #{tpu_custom_call.1} parent=1 // pred_fallthru
      _
    // Predicated region
    $region6: #{tpu_custom_call.1} parent=1 // pred_check
      _
    $region7: #{tpu_custom_call.1} parent=1 // pred_check_branch
      %11 = sbr.rel (0) target = $region9
    $region8: #{tpu_custom_call.1} parent=1 // pred_region
      _
    $region9: #{tpu_custom_call.1} parent=1 // pred_fallthru
      _
    %v13 = vld [vmem:[%s0] sm:$0xff]
    %v14 = vld [vmem:[%s0 + $0x8] sm:$0xff]
    %v15 = vld [vmem:[%s1] sm:$0xf]
    %v16 = vld [vmem:[%s1 + $0x4] sm:$0xf]
    %v17 = vld [vmem:[%s1 + $0x8] sm:$0xf]
    %v18 = vld [vmem:[%s1 + $0xc] sm:$0xf]
    %v19 = vld [vmem:[%s1 + $0x10] sm:$0xf]
    %v20 = vld [vmem:[%s1 + $0x14] sm:$0xf]
    %v21 = vld [vmem:[%s1 + $0x18] sm:$0xf]
    %v22 = vld [vmem:[%s1 + $0x1c] sm:$0xf]
    %v23 = vld [vmem:[%s1 + $0x20] sm:$0xf]
    %v24 = vld [vmem:[%s1 + $0x24] sm:$0xf]
    %v25 = vld [vmem:[%s1 + $0x28] sm:$0xf]
    %v26 = vld [vmem:[%s1 + $0x2c] sm:$0xf]
    %v27 = vld [vmem:[%s1 + $0x30] sm:$0xf]
    %v28 = vld [vmem:[%s1 + $0x34] sm:$0xf]
    %v29 = vld [vmem:[%s1 + $0x38] sm:$0xf]
    %v30 = vld [vmem:[%s1 + $0x3c] sm:$0xf]
    %v31 = vld [vmem:[%s1 + $0x40] sm:$0xf]
    %v32 = vld [vmem:[%s1 + $0x44] sm:$0xf]
    %v33 = vld [vmem:[%s1 + $0x48] sm:$0xf]
    %v34 = vld [vmem:[%s1 + $0x4c] sm:$0xf]
    %v35 = vld [vmem:[%s1 + $0x50] sm:$0xf]
    %v36 = vld [vmem:[%s1 + $0x54] sm:$0xf]
    %v37 = vld [vmem:[%s1 + $0x58] sm:$0xf]
    %v38 = vld [vmem:[%s1 + $0x5c] sm:$0xf]
    %v39 = vld [vmem:[%s1 + $0x60] sm:$0xf]
    %v40 = vld [vmem:[%s1 + $0x64] sm:$0xf]
    %v41 = vld [vmem:[%s1 + $0x68] sm:$0xf]
    %v42 = vld [vmem:[%s1 + $0x6c] sm:$0xf]
    %v43 = vld [vmem:[%s1 + $0x70] sm:$0xf]
    %v44 = vld [vmem:[%s1 + $0x74] sm:$0xf]
    %v45 = vld [vmem:[%s1 + $0x78] sm:$0xf]
    %v46 = vld [vmem:[%s1 + $0x7c] sm:$0xf]
    %v47 = vpack.c.bf16 %v13, %v13
    %v48 = vpack.c.bf16 %v14, %v14
    %v49 = vunpack.c.l.bf16 %v47
    %v50 = vunpack.c.l.bf16 %v48
    %v51 = vsub.f32 %v13, %v49
    %v52 = vsub.f32 %v14, %v50
    %v53 = vpack.c.bf16 %v51, %v51
    %v54 = vpack.c.bf16 %v52, %v52
    %v55 = vunpack.c.l.bf16 %v53
    %v56 = vunpack.c.l.bf16 %v54
    %v57 = vsub.f32 %v51, %v55
    %v58 = vsub.f32 %v52, %v56
    %v59 = vpack.c.bf16 %v57, %v57
    %v60 = vpack.c.bf16 %v58, %v58
    %v93 = vunpack.c.l.b16 %v15
    %v94 = vunpack.c.l.b16 %v16
    %v95 = vunpack.c.l.b16 %v17
    %v96 = vunpack.c.l.b16 %v18
    %v97 = vunpack.c.l.b16 %v19
    %v98 = vunpack.c.l.b16 %v20
    %v99 = vunpack.c.l.b16 %v21
    %v100 = vunpack.c.l.b16 %v22
    %v101 = vunpack.c.l.b16 %v23
    %v102 = vunpack.c.l.b16 %v24
    %v103 = vunpack.c.l.b16 %v25
    %v104 = vunpack.c.l.b16 %v26
    %v105 = vunpack.c.l.b16 %v27
    %v106 = vunpack.c.l.b16 %v28
    %v107 = vunpack.c.l.b16 %v29
    %v108 = vunpack.c.l.b16 %v30
    %v109 = vunpack.c.l.b16 %v31
    %v110 = vunpack.c.l.b16 %v32
    %v111 = vunpack.c.l.b16 %v33
    %v112 = vunpack.c.l.b16 %v34
    %v113 = vunpack.c.l.b16 %v35
    %v114 = vunpack.c.l.b16 %v36
    %v115 = vunpack.c.l.b16 %v37
    %v116 = vunpack.c.l.b16 %v38
    %v117 = vunpack.c.l.b16 %v39
    %v118 = vunpack.c.l.b16 %v40
    %v119 = vunpack.c.l.b16 %v41
    %v120 = vunpack.c.l.b16 %v42
    %v121 = vunpack.c.l.b16 %v43
    %v122 = vunpack.c.l.b16 %v44
    %v123 = vunpack.c.l.b16 %v45
    %v124 = vunpack.c.l.b16 %v46
    %v125 = vpack.c.b16 %v94, %v93
    %v126 = vpack.c.b16 %v96, %v95
    %v127 = vpack.c.b16 %v98, %v97
    %v128 = vpack.c.b16 %v100, %v99
    %v129 = vpack.c.b16 %v102, %v101
    %v130 = vpack.c.b16 %v104, %v103
    %v131 = vpack.c.b16 %v106, %v105
    %v132 = vpack.c.b16 %v108, %v107
    %v133 = vpack.c.b16 %v110, %v109
    %v134 = vpack.c.b16 %v112, %v111
    %v135 = vpack.c.b16 %v114, %v113
    %v136 = vpack.c.b16 %v116, %v115
    %v137 = vpack.c.b16 %v118, %v117
    %v138 = vpack.c.b16 %v120, %v119
    %v139 = vpack.c.b16 %v122, %v121
    %v140 = vpack.c.b16 %v124, %v123
    %157 = vmatprep.subr.bf16.mxu0 0
    %158 = vmatpush1.bf16.msra.mxu0 %v125
    %159 = vmatprep.subr.bf16.mxu0 0
    %160 = vmatpush1.bf16.msra.mxu0 %v126
    %161 = vmatprep.subr.bf16.mxu0 0
    %162 = vmatpush1.bf16.msra.mxu0 %v127
    %163 = vmatprep.subr.bf16.mxu0 0
    %164 = vmatpush1.bf16.msra.mxu0 %v128
    %165 = vmatprep.subr.bf16.mxu0 0
    %166 = vmatpush1.bf16.msra.mxu0 %v129
    %167 = vmatprep.subr.bf16.mxu0 0
    %168 = vmatpush1.bf16.msra.mxu0 %v130
    %169 = vmatprep.subr.bf16.mxu0 0
    %170 = vmatpush1.bf16.msra.mxu0 %v131
    %171 = vmatprep.subr.bf16.mxu0 0
    %172 = vmatpush1.bf16.msra.mxu0 %v132
    %173 = vmatprep.subr.bf16.mxu0 0
    %174 = vmatpush1.bf16.msra.mxu0 %v133
    %175 = vmatprep.subr.bf16.mxu0 0
    %176 = vmatpush1.bf16.msra.mxu0 %v134
    %177 = vmatprep.subr.bf16.mxu0 0
    %178 = vmatpush1.bf16.msra.mxu0 %v135
    %179 = vmatprep.subr.bf16.mxu0 0
    %180 = vmatpush1.bf16.msra.mxu0 %v136
    %181 = vmatprep.subr.bf16.mxu0 0
    %182 = vmatpush1.bf16.msra.mxu0 %v137
    %183 = vmatprep.subr.bf16.mxu0 0
    %184 = vmatpush1.bf16.msra.mxu0 %v138
    %185 = vmatprep.subr.bf16.mxu0 0
    %186 = vmatpush1.bf16.msra.mxu0 %v139
    %187 = vmatprep.subr.bf16.mxu0 0
    %188 = vmatpush1.bf16.msra.mxu0 %v140
    %189 = vmatprep.mubr.bf16.mxu0 %v54
    %190 = vmatmul.mubr.bf16.gmra.mrb[0].mxu0 %v53
    %v191 = vpop.f32.mrb[0].mxu0
    %v192 = vadd.f32 0.0, %v191
    %v193 = vpop.f32.mrb[0].mxu0
    %v194 = vpop.f32.mrb[0].mxu0
    %v195 = vpop.f32.mrb[0].mxu0
    %196 = vdwg.mxu0
    %197 = vmatprep.subr.bf16.mxu0 0
    %198 = vmatpush1.bf16.msra.mxu0 %v125
    %199 = vmatprep.subr.bf16.mxu0 0
    %200 = vmatpush1.bf16.msra.mxu0 %v126
    %201 = vmatprep.subr.bf16.mxu0 0
    %202 = vmatpush1.bf16.msra.mxu0 %v127
    %203 = vmatprep.subr.bf16.mxu0 0
    %204 = vmatpush1.bf16.msra.mxu0 %v128
    %205 = vmatprep.subr.bf16.mxu0 0
    %206 = vmatpush1.bf16.msra.mxu0 %v129
    %207 = vmatprep.subr.bf16.mxu0 0
    %208 = vmatpush1.bf16.msra.mxu0 %v130
    %209 = vmatprep.subr.bf16.mxu0 0
    %210 = vmatpush1.bf16.msra.mxu0 %v131
    %211 = vmatprep.subr.bf16.mxu0 0
    %212 = vmatpush1.bf16.msra.mxu0 %v132
    %213 = vmatprep.subr.bf16.mxu0 0
    %214 = vmatpush1.bf16.msra.mxu0 %v133
    %215 = vmatprep.subr.bf16.mxu0 0
    %216 = vmatpush1.bf16.msra.mxu0 %v134
    %217 = vmatprep.subr.bf16.mxu0 0
    %218 = vmatpush1.bf16.msra.mxu0 %v135
    %219 = vmatprep.subr.bf16.mxu0 0
    %220 = vmatpush1.bf16.msra.mxu0 %v136
    %221 = vmatprep.subr.bf16.mxu0 0
    %222 = vmatpush1.bf16.msra.mxu0 %v137
    %223 = vmatprep.subr.bf16.mxu0 0
    %224 = vmatpush1.bf16.msra.mxu0 %v138
    %225 = vmatprep.subr.bf16.mxu0 0
    %226 = vmatpush1.bf16.msra.mxu0 %v139
    %227 = vmatprep.subr.bf16.mxu0 0
    %228 = vmatpush1.bf16.msra.mxu0 %v140
    %229 = vmatprep.mubr.bf16.mxu0 %v48
    %230 = vmatmul.mubr.bf16.gmra.mrb[0].mxu0 %v47
    %v231 = vpop.f32.mrb[0].mxu0
    %v232 = vadd.f32 %v192, %v231
    %v233 = vpop.f32.mrb[0].mxu0
    %v234 = vpop.f32.mrb[0].mxu0
    %v235 = vpop.f32.mrb[0].mxu0
    %236 = vdwg.mxu0
    %237 = vmatprep.subr.bf16.mxu0 0
    %238 = vmatpush1.bf16.msra.mxu0 %v125
    %239 = vmatprep.subr.bf16.mxu0 0
    %240 = vmatpush1.bf16.msra.mxu0 %v126
    %241 = vmatprep.subr.bf16.mxu0 0
    %242 = vmatpush1.bf16.msra.mxu0 %v127
    %243 = vmatprep.subr.bf16.mxu0 0
    %244 = vmatpush1.bf16.msra.mxu0 %v128
    %245 = vmatprep.subr.bf16.mxu0 0
    %246 = vmatpush1.bf16.msra.mxu0 %v129
    %247 = vmatprep.subr.bf16.mxu0 0
    %248 = vmatpush1.bf16.msra.mxu0 %v130
    %249 = vmatprep.subr.bf16.mxu0 0
    %250 = vmatpush1.bf16.msra.mxu0 %v131
    %251 = vmatprep.subr.bf16.mxu0 0
    %252 = vmatpush1.bf16.msra.mxu0 %v132
    %253 = vmatprep.subr.bf16.mxu0 0
    %254 = vmatpush1.bf16.msra.mxu0 %v133
    %255 = vmatprep.subr.bf16.mxu0 0
    %256 = vmatpush1.bf16.msra.mxu0 %v134
    %257 = vmatprep.subr.bf16.mxu0 0
    %258 = vmatpush1.bf16.msra.mxu0 %v135
    %259 = vmatprep.subr.bf16.mxu0 0
    %260 = vmatpush1.bf16.msra.mxu0 %v136
    %261 = vmatprep.subr.bf16.mxu0 0
    %262 = vmatpush1.bf16.msra.mxu0 %v137
    %263 = vmatprep.subr.bf16.mxu0 0
    %264 = vmatpush1.bf16.msra.mxu0 %v138
    %265 = vmatprep.subr.bf16.mxu0 0
    %266 = vmatpush1.bf16.msra.mxu0 %v139
    %267 = vmatprep.subr.bf16.mxu0 0
    %268 = vmatpush1.bf16.msra.mxu0 %v140
    %269 = vmatprep.mubr.bf16.mxu0 %v60
    %270 = vmatmul.mubr.bf16.gmra.mrb[0].mxu0 %v59
    %v271 = vpop.f32.mrb[0].mxu0
    %v272 = vadd.f32 0.0, %v271
    %v273 = vpop.f32.mrb[0].mxu0
    %v274 = vpop.f32.mrb[0].mxu0
    %v275 = vpop.f32.mrb[0].mxu0
    %276 = vdwg.mxu0
    %v277 = vadd.f32 %v232, %v272
    %vm278 = vcmask 517120
    %279 = vst.msk [vmem:[#allocation2] sm:$0x3] %vm278, 0.0
    %280 = vst.msk [vmem:[#allocation2 + $0x8] sm:$0x3] %vm278, 0.0
    %281 = vst.msk [vmem:[#allocation2 + $0x6] sm:$0x3] %vm278, 0.0
    %282 = vst.msk [vmem:[#allocation2 + $0xe] sm:$0x3] %vm278, 0.0
    %vm283 = vcmask 519168
    %284 = vst.msk [vmem:[#allocation2 + $0x2] sm:$0xf] %vm283, %v277
    %s285 = scalar_lea.vmem [#allocation2], 8
    %vm286 = vcmask 523268
    %287 = vst.msk [vmem:[%s285 - $0x2] sm:$0xf0] %vm286, %v277
    // Predicated region
    $region10: #{tpu_custom_call.1} parent=1 // pred_check
      _
    $region11: #{tpu_custom_call.1} parent=1 // pred_check_branch
      %289 = sbr.rel (0) target = $region13
    $region12: #{tpu_custom_call.1} parent=1 // pred_region
      %s291 = ssub.s32 256, 256
      %292 = vsyncadd [#allocation3], %s291
      %s293 = sshll.u32 [#allocation2], 4
      %s294 = int_to_ptr.vmem [resolvable:$true] %s293
      %299 = dma.vmem_to_hbm [thread:$0]  %s294, 256, %s2, [#allocation3], 128, 128, 8
    $region13: #{tpu_custom_call.1} parent=1 // pred_fallthru
      _
    // Predicated region
    $region14: #{tpu_custom_call.1} parent=1 // pred_check
      _
    $region15: #{tpu_custom_call.1} parent=1 // pred_check_branch
      %301 = sbr.rel (0) target = $region17
    $region16: #{tpu_custom_call.1} parent=1 // pred_region
      %302 = dma.done [#allocation3], 256
    $region17: #{tpu_custom_call.1} parent=1 // pred_fallthru
      _
    %303 = vsyncpa [#allocation3], 1

</llo_original>
